<compile_context>
chip_gen: v6e
topology: v6e:2x2x1
jax: 0.10.0
libtpu: 0.0.40
codegen_flags: <defaults>
</compile_context>

<pallas_src>
import functools

import jax
import jax.numpy as jnp
from jax.experimental import pallas as pl
from jax.experimental.pallas import tpu as pltpu


# ----------------------------- kernels ------------------------------------- #
def _conv_bn_relu_kernel(x_ref, w_ref, scale_ref, bias_ref, o_ref):
    # x_ref: (tm, CK)  im2col rows     w_ref: (CK, CO)  folded conv weight
    # scale/bias: (1, CO)  BN folded per-channel affine
    acc = jnp.dot(x_ref[...], w_ref[...], preferred_element_type=jnp.float32)
    y = acc * scale_ref[...] + bias_ref[...]
    o_ref[...] = jnp.maximum(y, 0.0).astype(o_ref.dtype)


def _conv_bn_relu_drop_kernel(x_ref, w_ref, scale_ref, bias_ref, mask_ref, o_ref):
    acc = jnp.dot(x_ref[...], w_ref[...], preferred_element_type=jnp.float32)
    y = acc * scale_ref[...] + bias_ref[...]
    y = jnp.maximum(y, 0.0) * mask_ref[...]  # mask already holds keep/(1-p)
    o_ref[...] = y.astype(o_ref.dtype)


# ----------------------------- wrapper -------------------------------------- #
def _round_up(v: int, m: int) -> int:
    return ((v + m - 1) // m) * m


def cnn1d_block_forward(
    x: jnp.ndarray,            # [B, C_in, L]
    weight: jnp.ndarray,       # [C_out, C_in, K]   (PyTorch Conv1d layout)
    gamma: jnp.ndarray,        # [C_out] BN weight
    beta: jnp.ndarray,         # [C_out] BN bias
    running_mean: jnp.ndarray, # [C_out]
    running_var: jnp.ndarray,  # [C_out]
    *,
    stride: int = 1,
    padding: int = 1,
    eps: float = 1e-5,
    dropout_p: float = 0.1,
    training: bool = False,
    dropout_key=None,
    row_tile: int = 512,
) -> jnp.ndarray:
    """Returns [B, C_out, L_out], matching CNN1DBlock.forward (eval-mode BN)."""
    B, C_in, L = x.shape
    C_out, C_in_w, K = weight.shape
    assert C_in_w == C_in
    L_out = (L + 2 * padding - K) // stride + 1

    # --- im2col (channels-last so channels land on the lane axis) ----------- #
    x_pad = jnp.pad(x, ((0, 0), (0, 0), (padding, padding)))
    cols = jnp.stack(
        [x_pad[:, :, k : k + (L_out - 1) * stride + 1 : stride] for k in range(K)],
        axis=-1,
    )  # [B, C_in, L_out, K]
    x_unf = jnp.transpose(cols, (0, 2, 1, 3)).reshape(B * L_out, C_in * K)

    # weight[(c,k), co] so that x_unf @ w_mat == conv output (channels-last)
    w_mat = jnp.transpose(weight, (1, 2, 0)).reshape(C_in * K, C_out)

    # --- fold BatchNorm (running-stats form) into per-channel scale+bias ---- #
    # TODO(synk): training-mode BatchNorm batch statistics (reduction over B*L)
    # are not computed in-kernel; this uses the inference/running-stats form.
    scale = gamma / jnp.sqrt(running_var + eps)
    bias = beta - running_mean * scale

    # --- padding / tiling for lane-dense, row-tiled blocks ------------------ #
    M = B * L_out
    CK = C_in * K
    CK_pad = _round_up(max(CK, 1), 128)
    CO_pad = _round_up(max(C_out, 1), 128)
    tm = min(_round_up(row_tile, 8), _round_up(M, 8))
    M_pad = _round_up(M, tm)

    x_unf = jnp.pad(x_unf, ((0, M_pad - M), (0, CK_pad - CK))).astype(jnp.float32)
    w_mat = jnp.pad(w_mat, ((0, CK_pad - CK), (0, CO_pad - C_out))).astype(jnp.float32)
    scale = jnp.pad(scale, (0, CO_pad - C_out)).reshape(1, CO_pad).astype(jnp.float32)
    bias = jnp.pad(bias, (0, CO_pad - C_out)).reshape(1, CO_pad).astype(jnp.float32)

    grid = (M_pad // tm,)
    x_spec = pl.BlockSpec((tm, CK_pad), lambda i: (i, 0))
    w_spec = pl.BlockSpec((CK_pad, CO_pad), lambda i: (0, 0))
    v_spec = pl.BlockSpec((1, CO_pad), lambda i: (0, 0))
    o_spec = pl.BlockSpec((tm, CO_pad), lambda i: (i, 0))

    args = [x_unf, w_mat, scale, bias]
    in_specs = [x_spec, w_spec, v_spec, v_spec]

    if training and dropout_p > 0.0:
        if dropout_key is None:
            dropout_key = jax.random.PRNGKey(0)
        keep = jax.random.bernoulli(dropout_key, 1.0 - dropout_p, (M_pad, CO_pad))
        mask = keep.astype(jnp.float32) * (1.0 / (1.0 - dropout_p))
        args.append(mask)
        in_specs.append(pl.BlockSpec((tm, CO_pad), lambda i: (i, 0)))
        kernel = _conv_bn_relu_drop_kernel
    else:
        kernel = _conv_bn_relu_kernel

    out = pl.pallas_call(
        kernel,
        out_shape=jax.ShapeDtypeStruct((M_pad, CO_pad), x.dtype),
        grid=grid,
        in_specs=in_specs,
        out_specs=o_spec,
        compiler_params=pltpu.CompilerParams(
            dimension_semantics=("parallel",),
            vmem_limit_bytes=32 * 1024 * 1024,
        ),
    )(*args)

    out = out[:M, :C_out].reshape(B, L_out, C_out)
    return jnp.transpose(out, (0, 2, 1))  # [B, C_out, L_out]


# ------------------------------ test ---------------------------------------- #
if __name__ == "__main__":
    B, C_IN, C_OUT, L = 2, 4, 8, 16
    K, STRIDE, PAD = 3, 1, 1
    DROPOUT = 0.1
    EPS = 1e-5

    root = jax.random.PRNGKey(0)
    kx, kw, kg, kb, km, kv, kd = jax.random.split(root, 7)
    x = jax.random.normal(kx, (B, C_IN, L), dtype=jnp.float32)
    w = 0.1 * jax.random.normal(kw, (C_OUT, C_IN, K), dtype=jnp.float32)
    gamma = 1.0 + 0.1 * jax.random.normal(kg, (C_OUT,), dtype=jnp.float32)
    beta = 0.1 * jax.random.normal(kb, (C_OUT,), dtype=jnp.float32)
    r_mean = 0.1 * jax.random.normal(km, (C_OUT,), dtype=jnp.float32)
    r_var = jax.random.uniform(kv, (C_OUT,), minval=0.5, maxval=1.5, dtype=jnp.float32)

    # Eval-mode forward (dropout identity) — verify vs pure-JAX reference.
    out = cnn1d_block_forward(
        x, w, gamma, beta, r_mean, r_var,
        stride=STRIDE, padding=PAD, eps=EPS,
        dropout_p=DROPOUT, training=False,
    )
    out = jax.block_until_ready(out)

    conv = jax.lax.conv_general_dilated(
        x, w, window_strides=(STRIDE,), padding=[(PAD, PAD)],
        dimension_numbers=("NCH", "OIH", "NCH"),
    )
    ref = (conv - r_mean[None, :, None]) / jnp.sqrt(r_var + EPS)[None, :, None]
    ref = ref * gamma[None, :, None] + beta[None, :, None]
    ref = jnp.maximum(ref, 0.0)
    assert out.shape == ref.shape, (out.shape, ref.shape)
    assert jnp.allclose(out, ref, atol=1e-4, rtol=1e-4), "mismatch vs reference"

    # Also exercise the training path (dropout mask applied in-kernel).
    out_train = cnn1d_block_forward(
        x, w, gamma, beta, r_mean, r_var,
        stride=STRIDE, padding=PAD, eps=EPS,
        dropout_p=DROPOUT, training=True, dropout_key=kd,
    )
    jax.block_until_ready(out_train)

    print("KERNEL_OK")
</pallas_src>

<mosaic_0001>
module attributes {stable_mosaic.version = 11 : i64} {
  func.func @_conv_bn_relu_kernel(%arg0: i32, %arg1: memref<32x128xf32, #tpu.memory_space<vmem>>, %arg2: memref<128x128xf32, #tpu.memory_space<vmem>>, %arg3: memref<1x128xf32, #tpu.memory_space<vmem>>, %arg4: memref<1x128xf32, #tpu.memory_space<vmem>>, %arg5: memref<32x128xf32, #tpu.memory_space<vmem>>) attributes {dimension_semantics = [#tpu.dimension_semantics<parallel>], iteration_bounds = array<i64: 1>, scalar_prefetch = 0 : i64, scratch_operands = 0 : i64, tpu.core_type = #tpu.core_type<tc>, window_params = [{transform_indices = @transform_0, window_bounds = array<i64: 32, 128>}, {pipeline_mode = #tpu.pipeline_mode<synchronous>, transform_indices = @transform_1, window_bounds = array<i64: 128, 128>}, {pipeline_mode = #tpu.pipeline_mode<synchronous>, transform_indices = @transform_2, window_bounds = array<i64: 1, 128>}, {pipeline_mode = #tpu.pipeline_mode<synchronous>, transform_indices = @transform_3, window_bounds = array<i64: 1, 128>}, {transform_indices = @transform_4, window_bounds = array<i64: 32, 128>}]} {
    %c0 = arith.constant 0 : index
    %c0_0 = arith.constant 0 : index
    %0 = vector.load %arg1[%c0, %c0_0] : memref<32x128xf32, #tpu.memory_space<vmem>>, vector<32x128xf32>
    %c0_1 = arith.constant 0 : index
    %c0_2 = arith.constant 0 : index
    %1 = vector.load %arg2[%c0_1, %c0_2] : memref<128x128xf32, #tpu.memory_space<vmem>>, vector<128x128xf32>
    %cst = arith.constant dense<0.000000e+00> : vector<32x128xf32>
    %2 = tpu.matmul %0, %1, %cst {dimension_numbers = #tpu.dot_dimension_numbers<[1], [0], [0], [1], [0, 0, 1, 1], [], []>} : vector<32x128xf32>, vector<128x128xf32>, vector<32x128xf32> -> vector<32x128xf32>
    %c0_3 = arith.constant 0 : index
    %c0_4 = arith.constant 0 : index
    %3 = vector.load %arg3[%c0_3, %c0_4] : memref<1x128xf32, #tpu.memory_space<vmem>>, vector<1x128xf32>
    %4 = vector.broadcast %3 : vector<1x128xf32> to vector<32x128xf32>
    %5 = arith.mulf %2, %4 : vector<32x128xf32>
    %c0_5 = arith.constant 0 : index
    %c0_6 = arith.constant 0 : index
    %6 = vector.load %arg4[%c0_5, %c0_6] : memref<1x128xf32, #tpu.memory_space<vmem>>, vector<1x128xf32>
    %7 = vector.broadcast %6 : vector<1x128xf32> to vector<32x128xf32>
    %8 = arith.addf %5, %7 : vector<32x128xf32>
    %cst_7 = arith.constant 0.000000e+00 : f32
    %9 = vector.broadcast %cst_7 : f32 to vector<32x128xf32>
    %10 = arith.maximumf %8, %9 : vector<32x128xf32>
    %c0_8 = arith.constant 0 : index
    %c0_9 = arith.constant 0 : index
    %11 = vector.load %arg5[%c0_8, %c0_9] : memref<32x128xf32, #tpu.memory_space<vmem>>, vector<32x128xf32>
    tpu.vector_store %arg5[%c0_8, %c0_9], %10 {strides = array<i32>} : memref<32x128xf32, #tpu.memory_space<vmem>>, vector<32x128xf32>,
    return
  }
  func.func @transform_0(%arg0: i32) -> (i32, i32) {
    %c0_i32 = arith.constant 0 : i32
    %c0_i32_0 = arith.constant 0 : i32
    return %arg0, %c0_i32 : i32, i32
  }
  func.func @transform_1(%arg0: i32) -> (i32, i32) {
    %c0_i32 = arith.constant 0 : i32
    %c0_i32_0 = arith.constant 0 : i32
    %c0_i32_1 = arith.constant 0 : i32
    return %c0_i32, %c0_i32_0 : i32, i32
  }
  func.func @transform_2(%arg0: i32) -> (i32, i32) {
    %c0_i32 = arith.constant 0 : i32
    %c0_i32_0 = arith.constant 0 : i32
    %c0_i32_1 = arith.constant 0 : i32
    return %c0_i32, %c0_i32_0 : i32, i32
  }
  func.func @transform_3(%arg0: i32) -> (i32, i32) {
    %c0_i32 = arith.constant 0 : i32
    %c0_i32_0 = arith.constant 0 : i32
    %c0_i32_1 = arith.constant 0 : i32
    return %c0_i32, %c0_i32_0 : i32, i32
  }
  func.func @transform_4(%arg0: i32) -> (i32, i32) {
    %c0_i32 = arith.constant 0 : i32
    %c0_i32_0 = arith.constant 0 : i32
    return %arg0, %c0_i32 : i32, i32
  }
}

</mosaic_0001>

<llo_original>
// kernel: tpu_custom_call.1
$region0: #{tpu_custom_call.1}
  #allocation0 [shape = 'u32[]', space=smem, size = 0x4, offset = 0x4, fixed_abs, tag = 'smem constant byte address 0x4 - core index']
  #allocation1 [shape = 'u32[144,128]{1,0:T(1,128)}', space=vmem, size = 0x12000, scoped, tag = 'internal scratch']
  %s0 = inlined_call_operand.hbm [shape: f32[32,128], index: 0, kind: input, shape index: {}]
  %s1 = inlined_call_operand.hbm [shape: f32[128,128], index: 1, kind: input, shape index: {}]
  %s2 = inlined_call_operand.vmem [shape: f32[1,128], index: 2, kind: input, shape index: {}]
  %s3 = inlined_call_operand.vmem [shape: f32[1,128], index: 3, kind: input, shape index: {}]
  %s4 = inlined_call_operand.hbm [shape: f32[32,128], index: 4, kind: output, shape index: {}]
  %s5 = sld [smem:[#allocation0]]
  $region34: #{tpu_custom_call.1} parent=0
    _
  %s7 = ssub.s32 1, %s5
  %s8 = scalar_select 0, %s7, %s5
  $region1: #{tpu_custom_call.1} parent=0
    #allocation2 [shape = 'u8[16384]{0}', space=vmem, size = 0x4000, scoped, tag = 'input window, operand 0, single buffered']
    #allocation3 [shape = 's32[1]{0}', space=sflag, size = 0x4, scoped, tag = 'scoped memory for tpu_custom_call.1']
    #allocation4 [shape = 's32[1]{0}', space=sflag, size = 0x4, scoped, tag = 'scoped memory for tpu_custom_call.1']
    #allocation5 [shape = 'u8[65536]{0}', space=vmem, size = 0x10000, scoped, tag = 'input window, operand 1, single buffered']
    #allocation6 [shape = 's32[1]{0}', space=sflag, size = 0x4, scoped, tag = 'scoped memory for tpu_custom_call.1']
    #allocation7 [shape = 'u8[16384]{0}', space=vmem, size = 0x4000, scoped, tag = 'output window, operand 0, single buffered']
    %9 = vsyncpa [#allocation3], 0
    %10 = vsyncpa [#allocation6], 0
    %11 = vsyncpa [#allocation4], 0
    // Predicated region
    $region2: #{tpu_custom_call.1} parent=1 // pred_check
      _
    $region3: #{tpu_custom_call.1} parent=1 // pred_check_branch
      %13 = sbr.rel (0) target = $region5
    $region4: #{tpu_custom_call.1} parent=1 // pred_region
      %s15 = ssub.s32 512, 512
      %16 = vsyncadd [#allocation3], %s15
      %s17 = sshll.u32 [#allocation2], 4
      %s18 = int_to_ptr.vmem [resolvable:$true] %s17
      %23 = dma.hbm_to_vmem [thread:$0]  %s0, 512, %s18, [#allocation3], 128, 128, 8
    $region5: #{tpu_custom_call.1} parent=1 // pred_fallthru
      _
    // Predicated region
    $region6: #{tpu_custom_call.1} parent=1 // pred_check
      _
    $region7: #{tpu_custom_call.1} parent=1 // pred_check_branch
      %25 = sbr.rel (0) target = $region9
    $region8: #{tpu_custom_call.1} parent=1 // pred_region
      %s27 = ssub.s32 2048, 2048
      %28 = vsyncadd [#allocation6], %s27
      %s29 = sshll.u32 [#allocation5], 4
      %s30 = int_to_ptr.vmem [resolvable:$true] %s29
      %35 = dma.hbm_to_vmem [thread:$0]  %s1, 2048, %s30, [#allocation6], 128, 128, 8
    $region9: #{tpu_custom_call.1} parent=1 // pred_fallthru
      _
    // Predicated region
    $region10: #{tpu_custom_call.1} parent=1 // pred_check
      _
    $region11: #{tpu_custom_call.1} parent=1 // pred_check_branch
      %37 = sbr.rel (0) target = $region13
    $region12: #{tpu_custom_call.1} parent=1 // pred_region
      _
    $region13: #{tpu_custom_call.1} parent=1 // pred_fallthru
      _
    // Predicated region
    $region14: #{tpu_custom_call.1} parent=1 // pred_check
      _
    $region15: #{tpu_custom_call.1} parent=1 // pred_check_branch
      %39 = sbr.rel (0) target = $region17
    $region16: #{tpu_custom_call.1} parent=1 // pred_region
      _
    $region17: #{tpu_custom_call.1} parent=1 // pred_fallthru
      _
    // Predicated region
    $region18: #{tpu_custom_call.1} parent=1 // pred_check
      _
    $region19: #{tpu_custom_call.1} parent=1 // pred_check_branch
      %41 = sbr.rel (0) target = $region21
    $region20: #{tpu_custom_call.1} parent=1 // pred_region
      %42 = dma.done [#allocation3], 512
    $region21: #{tpu_custom_call.1} parent=1 // pred_fallthru
      _
    // Predicated region
    $region22: #{tpu_custom_call.1} parent=1 // pred_check
      _
    $region23: #{tpu_custom_call.1} parent=1 // pred_check_branch
      %44 = sbr.rel (0) target = $region25
    $region24: #{tpu_custom_call.1} parent=1 // pred_region
      %45 = dma.done [#allocation6], 2048
    $region25: #{tpu_custom_call.1} parent=1 // pred_fallthru
      _
    %v46 = vld [vmem:[#allocation2] sm:$0xff]
    %v47 = vld [vmem:[#allocation2 + $0x8] sm:$0xff]
    %v48 = vld [vmem:[#allocation2 + $0x10] sm:$0xff]
    %v49 = vld [vmem:[#allocation2 + $0x18] sm:$0xff]
    %v50 = vld [vmem:[#allocation5] sm:$0xff]
    %v51 = vld [vmem:[#allocation5 + $0x8] sm:$0xff]
    %v52 = vld [vmem:[#allocation5 + $0x10] sm:$0xff]
    %v53 = vld [vmem:[#allocation5 + $0x18] sm:$0xff]
    %v54 = vld [vmem:[#allocation5 + $0x20] sm:$0xff]
    %v55 = vld [vmem:[#allocation5 + $0x28] sm:$0xff]
    %v56 = vld [vmem:[#allocation5 + $0x30] sm:$0xff]
    %v57 = vld [vmem:[#allocation5 + $0x38] sm:$0xff]
    %v58 = vld [vmem:[#allocation5 + $0x40] sm:$0xff]
    %v59 = vld [vmem:[#allocation5 + $0x48] sm:$0xff]
    %v60 = vld [vmem:[#allocation5 + $0x50] sm:$0xff]
    %v61 = vld [vmem:[#allocation5 + $0x58] sm:$0xff]
    %v62 = vld [vmem:[#allocation5 + $0x60] sm:$0xff]
    %v63 = vld [vmem:[#allocation5 + $0x68] sm:$0xff]
    %v64 = vld [vmem:[#allocation5 + $0x70] sm:$0xff]
    %v65 = vld [vmem:[#allocation5 + $0x78] sm:$0xff]
    %66 = vmatprep.subr.mxu0 0.0
    %67 = vmatpush1.msra.mxu0 %v65
    %68 = vmatprep.subr.mxu0 0.0
    %69 = vmatpush1.msra.mxu0 %v64
    %70 = vmatprep.subr.mxu0 0.0
    %71 = vmatpush1.msra.mxu0 %v63
    %72 = vmatprep.subr.mxu0 0.0
    %73 = vmatpush1.msra.mxu0 %v62
    %74 = vmatprep.subr.mxu0 0.0
    %75 = vmatpush1.msra.mxu0 %v61
    %76 = vmatprep.subr.mxu0 0.0
    %77 = vmatpush1.msra.mxu0 %v60
    %78 = vmatprep.subr.mxu0 0.0
    %79 = vmatpush1.msra.mxu0 %v59
    %80 = vmatprep.subr.mxu0 0.0
    %81 = vmatpush1.msra.mxu0 %v58
    %82 = vmatprep.subr.mxu0 0.0
    %83 = vmatpush1.msra.mxu0 %v57
    %84 = vmatprep.subr.mxu0 0.0
    %85 = vmatpush1.msra.mxu0 %v56
    %86 = vmatprep.subr.mxu0 0.0
    %87 = vmatpush1.msra.mxu0 %v55
    %88 = vmatprep.subr.mxu0 0.0
    %89 = vmatpush1.msra.mxu0 %v54
    %90 = vmatprep.subr.mxu0 0.0
    %91 = vmatpush1.msra.mxu0 %v53
    %92 = vmatprep.subr.mxu0 0.0
    %93 = vmatpush1.msra.mxu0 %v52
    %94 = vmatprep.subr.mxu0 0.0
    %95 = vmatpush1.msra.mxu0 %v51
    %96 = vmatprep.subr.mxu0 0.0
    %97 = vmatpush1.msra.mxu0 %v50
    %98 = vmatprep.subr.mxu0 0.0
    %99 = vmatpush2.msra.mxu0 0.0
    %100 = vmatprep.subr.mxu0 0.0
    %101 = vmatpush2.msra.mxu0 0.0
    %102 = vmatprep.subr.mxu0 0.0
    %103 = vmatpush2.msra.mxu0 0.0
    %104 = vmatprep.subr.mxu0 0.0
    %105 = vmatpush2.msra.mxu0 0.0
    %106 = vmatprep.subr.mxu0 0.0
    %107 = vmatpush2.msra.mxu0 0.0
    %108 = vmatprep.subr.mxu0 0.0
    %109 = vmatpush2.msra.mxu0 0.0
    %110 = vmatprep.subr.mxu0 0.0
    %111 = vmatpush2.msra.mxu0 0.0
    %112 = vmatprep.subr.mxu0 0.0
    %113 = vmatpush2.msra.mxu0 0.0
    %114 = vmatprep.subr.mxu0 0.0
    %115 = vmatpush2.msra.mxu0 0.0
    %116 = vmatprep.subr.mxu0 0.0
    %117 = vmatpush2.msra.mxu0 0.0
    %118 = vmatprep.subr.mxu0 0.0
    %119 = vmatpush2.msra.mxu0 0.0
    %120 = vmatprep.subr.mxu0 0.0
    %121 = vmatpush2.msra.mxu0 0.0
    %122 = vmatprep.subr.mxu0 0.0
    %123 = vmatpush2.msra.mxu0 0.0
    %124 = vmatprep.subr.mxu0 0.0
    %125 = vmatpush2.msra.mxu0 0.0
    %126 = vmatprep.subr.mxu0 0.0
    %127 = vmatpush2.msra.mxu0 0.0
    %128 = vmatprep.subr.mxu0 0.0
    %129 = vmatpush2.msra.mxu0 0.0
    %130 = vmatprep.mubr.f32.mxu0 0.0
    %131 = vmatmul.mubr.f32.gmra.mxu0 %v46
    %v132 = vpop.f32.mrf.mxu0
    %v133 = vadd.f32 0.0, %v132
    %v134 = vpop.f32.mrf.mxu0
    %135 = vmatprep.mubr.f32.mxu0 0.0
    %136 = vmatmul.mubr.f32.gmra.mxu0 %v47
    %v137 = vpop.f32.mrf.mxu0
    %v138 = vadd.f32 0.0, %v137
    %v139 = vpop.f32.mrf.mxu0
    %140 = vmatprep.mubr.f32.mxu0 0.0
    %141 = vmatmul.mubr.f32.gmra.mxu0 %v48
    %v142 = vpop.f32.mrf.mxu0
    %v143 = vadd.f32 0.0, %v142
    %v144 = vpop.f32.mrf.mxu0
    %145 = vmatprep.mubr.f32.mxu0 0.0
    %146 = vmatmul.mubr.f32.gmra.mxu0 %v49
    %v147 = vpop.f32.mrf.mxu0
    %v148 = vadd.f32 0.0, %v147
    %v149 = vpop.f32.mrf.mxu0
    %150 = vdwg.mxu0
    %v151 = vld [vmem:[%s2] sm:$0x1]
    %v153 = vlaneseq
    %v154 = vshrl.u32 %v153, 7
    %v155 = vsub.s32 0, %v154
    %v156 = vrot.slane %v151, %v155
    %v158 = vmul.f32 %v133, %v156
    %v159 = vmul.f32 %v138, %v156
    %v160 = vmul.f32 %v143, %v156
    %v161 = vmul.f32 %v148, %v156
    %v162 = vld [vmem:[%s3] sm:$0x1]
    %v164 = vlaneseq
    %v165 = vshrl.u32 %v164, 7
    %v166 = vsub.s32 0, %v165
    %v167 = vrot.slane %v162, %v166
    %v169 = vadd.f32 %v158, %v167
    %v170 = vadd.f32 %v159, %v167
    %v171 = vadd.f32 %v160, %v167
    %v172 = vadd.f32 %v161, %v167
    %v173 = vmax.f32 %v169, 0.0
    %v174 = vmax.f32 %v170, 0.0
    %v175 = vmax.f32 %v171, 0.0
    %v176 = vmax.f32 %v172, 0.0
    %177 = vst [vmem:[#allocation7] sm:$0xff] %v173
    %178 = vst [vmem:[#allocation7 + $0x8] sm:$0xff] %v174
    %179 = vst [vmem:[#allocation7 + $0x10] sm:$0xff] %v175
    %180 = vst [vmem:[#allocation7 + $0x18] sm:$0xff] %v176
    // Predicated region
    $region26: #{tpu_custom_call.1} parent=1 // pred_check
      _
    $region27: #{tpu_custom_call.1} parent=1 // pred_check_branch
      %182 = sbr.rel (0) target = $region29
    $region28: #{tpu_custom_call.1} parent=1 // pred_region
      %s184 = ssub.s32 512, 512
      %185 = vsyncadd [#allocation4], %s184
      %s186 = sshll.u32 [#allocation7], 4
      %s187 = int_to_ptr.vmem [resolvable:$true] %s186
      %192 = dma.vmem_to_hbm [thread:$0]  %s187, 512, %s4, [#allocation4], 128, 128, 8
    $region29: #{tpu_custom_call.1} parent=1 // pred_fallthru
      _
    // Predicated region
    $region30: #{tpu_custom_call.1} parent=1 // pred_check
      _
    $region31: #{tpu_custom_call.1} parent=1 // pred_check_branch
      %194 = sbr.rel (0) target = $region33
    $region32: #{tpu_custom_call.1} parent=1 // pred_region
      %195 = dma.done [#allocation4], 512
    $region33: #{tpu_custom_call.1} parent=1 // pred_fallthru
      _
    %196 = vsyncpa [#allocation3], 1
    %197 = vsyncpa [#allocation6], 1
    %198 = vsyncpa [#allocation4], 1

</llo_original>
